<compile_context>
chip_gen: v7x
topology: tpu7x:2x2x1
jax: 0.10.0
libtpu: 0.0.40
codegen_flags: <defaults>
</compile_context>

<pallas_src>
import functools

import jax
import jax.numpy as jnp
from jax.experimental import pallas as pl
from jax.experimental.pallas import tpu as pltpu

# TODO(synk): `tensor_gray` is not defined in the provided source; standard
# ITU-R BT.601 luma weights are assumed (the usual definition in SCI/Retinex repos).
_GRAY_W = (0.299, 0.587, 0.114)


def _gray(x_chw):
    # x_chw: (3, TH, W) -> (TH, W)
    return _GRAY_W[0] * x_chw[0] + _GRAY_W[1] * x_chw[1] + _GRAY_W[2] * x_chw[2]


def _sci_loss_kernel(in0_ref, in1_ref, r0_ref, r1_ref, l0_ref, l1_ref,
                     out_ref, carry_ref, *, tile_h, width):
    """Accumulates 5 lane-partial (8, W) sums per batch element.

    out_ref block (1, 5, 8, W), resident across the row-tile axis:
      [0] sum (R0-R1)^2 + (R0-in0)^2 + (R1-in1)^2   (loss_R numerator)
      [1] sum (in0-in1)^2                           (loss_in numerator)
      [2] illu(L0,in0) + illu(L1,in1)               (loss_L numerator)
      [3] smooth-x of R0 + R1                       (loss_smooth x numerator)
      [4] smooth-y of R0 + R1                       (loss_smooth y numerator)
    carry_ref (VMEM, (2, 1, W)): last gray row of R0/R1 from the previous row tile.
    """
    th, w = tile_h, width
    t = pl.program_id(1)

    @pl.when(t == 0)
    def _init():
        out_ref[...] = jnp.zeros_like(out_ref)
        carry_ref[...] = jnp.zeros_like(carry_ref)

    in0 = in0_ref[0]          # (3, TH, W)
    in1 = in1_ref[0]
    r0 = r0_ref[0]
    r1 = r1_ref[0]
    l0 = l0_ref[0, 0]         # (TH, W)
    l1 = l1_ref[0, 0]

    def rows8(x):
        # (TH, W) -> (8, W): sum aligned 8-row groups; pure vreg-wise VPU adds.
        acc = x[0:8]
        for r in range(8, th, 8):
            acc = acc + x[r:r + 8]
        return acc

    def chan_rows8(x):
        # (3, TH, W) -> (8, W)
        return rows8(x[0] + x[1] + x[2])

    # --- MSE partial sums (sums of squared differences) ----------------------
    d_rr = r0 - r1
    d_r0 = r0 - in0
    d_r1 = r1 - in1
    out_ref[0, 0] += chan_rows8(d_rr * d_rr + d_r0 * d_r0 + d_r1 * d_r1)
    d_in = in0 - in1
    out_ref[0, 1] += chan_rows8(d_in * d_in)

    g_in0 = _gray(in0)
    g_in1 = _gray(in1)
    g_r0 = _gray(r0)
    g_r1 = _gray(r1)

    # --- illumination term ----------------------------------------------------
    def illu(l, g):
        v = (jnp.exp(1.5 * l) - 2.0) * (jnp.exp(1.5 * g) - 2.0) + 1.0
        return jnp.clip(v, 0.0, 5.0)

    out_ref[0, 2] += rows8(illu(l0, g_in0) + illu(l1, g_in1))

    # --- smoothness terms -------------------------------------------------------
    col0 = jax.lax.broadcasted_iota(jnp.int32, (th, w), 1) == 0
    row0 = jax.lax.broadcasted_iota(jnp.int32, (th, w), 0) == 0

    def f(dv):
        return dv * jnp.exp(-10.0 * dv)

    def smooth_terms(g, slot):
        # x: rolled diff covers every lane, including exactly one wrap-around
        # term |g[:,0]-g[:,W-1]| per row (whichever position the roll convention
        # puts it at); subtract its f() once per row -> direction independent,
        # and the main term needs no masking.
        dx = jnp.abs(pltpu.roll(g, shift=1, axis=1) - g)            # (TH, W)
        wrap_x = f(jnp.abs(g[:, 0:1] - g[:, w - 1:w]))              # (TH, 1)
        fx = f(dx) - jnp.where(col0, wrap_x, 0.0)

        # y: same wrap correction along rows, plus the tile-seam term
        # |g[0] - carry| (previous tile's last gray row), active for t > 0.
        dy = jnp.abs(pltpu.roll(g, shift=1, axis=0) - g)            # (TH, W)
        wrap_y = f(jnp.abs(g[0:1, :] - g[th - 1:th, :]))            # (1, W)
        seam = jnp.abs(g[0:1, :] - carry_ref[slot])                 # (1, W)
        f_seam = jnp.where(t > 0, f(seam), 0.0)
        fy = f(dy) + jnp.where(row0, f_seam - wrap_y, 0.0)

        # stash this tile's last gray row for the next row tile.
        carry_ref[slot] = g[th - 1:th, :]
        return fx, fy

    fx0, fy0 = smooth_terms(g_r0, 0)
    fx1, fy1 = smooth_terms(g_r1, 1)
    out_ref[0, 3] += rows8(fx0 + fx1)
    out_ref[0, 4] += rows8(fy0 + fy1)


def _pick_tile_h(H, W, C):
    # Keep the double-buffered per-step input working set around <= ~12 MiB so
    # it fits comfortably inside scoped VMEM on v5e/v6e/v7x while still giving
    # blocks big enough to reach the HBM roofline.
    bytes_per_row = (4 * C + 2) * W * 4
    max_th = max(8, (12 * 1024 * 1024) // (2 * bytes_per_row))
    th = 8
    cand = 8
    while cand <= min(H, 256):
        if H % cand == 0 and cand <= max_th:
            th = cand
        cand += 8
    return th


def sci_loss(in_list, R_list, L_list, nL_list=None, stage=2, tile_h=None):
    del nL_list, stage  # unused by the PyTorch forward pass
    in0, in1 = in_list
    r0, r1 = R_list
    l0, l1 = L_list
    N, C, H, W = in0.shape
    assert C == 3, "SCI_loss expects RGB inputs"
    assert l0.shape == (N, 1, H, W)
    assert H % 8 == 0, "H must be a multiple of 8 (sublane tiling)"

    if tile_h is None:
        tile_h = _pick_tile_h(H, W, C)
    assert tile_h % 8 == 0 and H % tile_h == 0
    num_tiles = H // tile_h

    kernel = functools.partial(_sci_loss_kernel, tile_h=tile_h, width=W)

    img_spec = pl.BlockSpec((1, C, tile_h, W), lambda b, t: (b, 0, t, 0))
    illu_spec = pl.BlockSpec((1, 1, tile_h, W), lambda b, t: (b, 0, t, 0))
    out_spec = pl.BlockSpec((1, 5, 8, W), lambda b, t: (b, 0, 0, 0))

    n_pix = N * H * W
    cost = pl.CostEstimate(
        flops=60 * n_pix,
        transcendentals=8 * n_pix,
        bytes_accessed=4 * (14 * n_pix + N * 5 * 8 * W),
    )

    partials = pl.pallas_call(
        kernel,
        out_shape=jax.ShapeDtypeStruct((N, 5, 8, W), jnp.float32),
        grid=(N, num_tiles),
        in_specs=[img_spec, img_spec, img_spec, img_spec, illu_spec, illu_spec],
        out_specs=out_spec,
        scratch_shapes=[pltpu.VMEM((2, 1, W), jnp.float32)],
        compiler_params=pltpu.CompilerParams(
            dimension_semantics=("parallel", "arbitrary"),
            vmem_limit_bytes=32 * 1024 * 1024),
        cost_estimate=cost,
    )(in0, in1, r0, r1, l0, l1)

    # Final cross-lane reduction + scalar glue (same combination as PyTorch).
    s = jnp.sum(partials, axis=(0, 2, 3))          # (5,)

    cnt_rgb = N * C * H * W
    cnt_gray = N * H * W
    cnt_gx = N * H * (W - 1)
    cnt_gy = N * (H - 1) * W

    loss_R = s[0] / cnt_rgb
    loss_in = s[1] / cnt_rgb
    loss_L = s[2] / cnt_gray
    loss_smooth = s[3] / cnt_gx + s[4] / cnt_gy
    return 2.0 * loss_R + 0.1 * loss_smooth + loss_in + loss_L


# ----------------------- pure-JAX reference (for checking) ------------------
def _gray_ref(x):
    return _GRAY_W[0] * x[:, 0] + _GRAY_W[1] * x[:, 1] + _GRAY_W[2] * x[:, 2]


def _smooth_R_ref(r):
    g = _gray_ref(r)[:, None]                                     # (N,1,H,W)
    gx = jnp.abs(g[..., :, 1:] - g[..., :, :-1])
    gy = jnp.abs(g[..., 1:, :] - g[..., :-1, :])
    return jnp.mean(gx * jnp.exp(-10.0 * gx)) + jnp.mean(gy * jnp.exp(-10.0 * gy))


def _illu_loss_ref(x, img):
    g = _gray_ref(img)[:, None]
    v = (jnp.exp(1.5 * x) - 2.0) * (jnp.exp(1.5 * g) - 2.0) + 1.0
    return jnp.mean(jnp.clip(v, 0.0, 5.0))


def sci_loss_ref(in_list, R_list, L_list):
    in0, in1 = in_list
    r0, r1 = R_list
    l0, l1 = L_list
    mse = lambda a, b: jnp.mean((a - b) ** 2)
    loss_R = mse(r0, r1) + mse(r0, in0) + mse(r1, in1)
    loss_L = _illu_loss_ref(l0, in0) + _illu_loss_ref(l1, in1)
    loss_smooth = _smooth_R_ref(r0) + _smooth_R_ref(r1)
    loss_in = mse(in0, in1)
    return 2.0 * loss_R + 0.1 * loss_smooth + loss_in + loss_L


if __name__ == "__main__":
    key = jax.random.PRNGKey(0)
    ks = jax.random.split(key, 7)
    # Small but lane-dense test shape: W = 128 keeps the lane dim full.
    N, C, H, W = 2, 3, 16, 128

    in0 = jax.random.uniform(ks[0], (N, C, H, W), jnp.float32)
    in1 = jax.random.uniform(ks[1], (N, C, H, W), jnp.float32)
    r0 = jax.random.uniform(ks[2], (N, C, H, W), jnp.float32)
    r1 = jax.random.uniform(ks[3], (N, C, H, W), jnp.float32)
    l0 = jax.random.uniform(ks[4], (N, 1, H, W), jnp.float32)
    l1 = jax.random.uniform(ks[5], (N, 1, H, W), jnp.float32)
    nl0 = jax.random.uniform(ks[6], (N, 1, H, W), jnp.float32)

    ref = jax.block_until_ready(sci_loss_ref([in0, in1], [r0, r1], [l0, l1]))

    # Two row tiles per image -> exercises the tile-seam carry path.
    loss = sci_loss([in0, in1], [r0, r1], [l0, l1], [nl0, nl0], tile_h=8)
    loss = jax.block_until_ready(loss)
    assert jnp.allclose(loss, ref, rtol=1e-3, atol=1e-3), (loss, ref)

    # Auto-picked tile (single tile per image here).
    loss2 = jax.block_until_ready(
        sci_loss([in0, in1], [r0, r1], [l0, l1], [nl0, nl0]))
    assert jnp.allclose(loss2, ref, rtol=1e-3, atol=1e-3), (loss2, ref)

    print("KERNEL_OK")
</pallas_src>

<mosaic_0001>
module attributes {stable_mosaic.version = 11 : i64} {
  func.func @_sci_loss_kernel(%arg0: i32, %arg1: i32, %arg2: memref<1x3x8x128xf32, #tpu.memory_space<vmem>>, %arg3: memref<1x3x8x128xf32, #tpu.memory_space<vmem>>, %arg4: memref<1x3x8x128xf32, #tpu.memory_space<vmem>>, %arg5: memref<1x3x8x128xf32, #tpu.memory_space<vmem>>, %arg6: memref<1x1x8x128xf32, #tpu.memory_space<vmem>>, %arg7: memref<1x1x8x128xf32, #tpu.memory_space<vmem>>, %arg8: memref<1x5x8x128xf32, #tpu.memory_space<vmem>>, %arg9: memref<2x1x128xf32, #tpu.memory_space<vmem>>) attributes {dimension_semantics = [#tpu.dimension_semantics<parallel>, #tpu.dimension_semantics<arbitrary>], iteration_bounds = array<i64: 2, 2>, scalar_prefetch = 0 : i64, scratch_operands = 1 : i64, tpu.core_type = #tpu.core_type<tc>, window_params = [{transform_indices = @transform_0, window_bounds = array<i64: 1, 3, 8, 128>}, {transform_indices = @transform_1, window_bounds = array<i64: 1, 3, 8, 128>}, {transform_indices = @transform_2, window_bounds = array<i64: 1, 3, 8, 128>}, {transform_indices = @transform_3, window_bounds = array<i64: 1, 3, 8, 128>}, {transform_indices = @transform_4, window_bounds = array<i64: 1, 1, 8, 128>}, {transform_indices = @transform_5, window_bounds = array<i64: 1, 1, 8, 128>}, {transform_indices = @transform_6, window_bounds = array<i64: 1, 5, 8, 128>}]} {
    %c0_i32 = arith.constant 0 : i32
    %0 = arith.cmpi eq, %arg1, %c0_i32 : i32
    %1 = arith.extui %0 : i1 to i32
    %c0_i32_0 = arith.constant 0 : i32
    %2 = arith.cmpi ne, %1, %c0_i32_0 : i32
    scf.if %2 {
      %cst_120 = arith.constant 0.000000e+00 : f32
      %284 = vector.broadcast %cst_120 : f32 to vector<1x5x8x128xf32>
      %c0_121 = arith.constant 0 : index
      %c0_122 = arith.constant 0 : index
      %c0_123 = arith.constant 0 : index
      %c0_124 = arith.constant 0 : index
      %285 = vector.load %arg8[%c0_121, %c0_122, %c0_123, %c0_124] : memref<1x5x8x128xf32, #tpu.memory_space<vmem>>, vector<1x5x8x128xf32>
      tpu.vector_store %arg8[%c0_121, %c0_122, %c0_123, %c0_124], %284 {strides = array<i32>} : memref<1x5x8x128xf32, #tpu.memory_space<vmem>>, vector<1x5x8x128xf32>,
      %cst_125 = arith.constant 0.000000e+00 : f32
      %286 = vector.broadcast %cst_125 : f32 to vector<2x1x128xf32>
      %c0_126 = arith.constant 0 : index
      %c0_127 = arith.constant 0 : index
      %c0_128 = arith.constant 0 : index
      %287 = vector.load %arg9[%c0_126, %c0_127, %c0_128] : memref<2x1x128xf32, #tpu.memory_space<vmem>>, vector<2x1x128xf32>
      tpu.vector_store %arg9[%c0_126, %c0_127, %c0_128], %286 {strides = array<i32>} : memref<2x1x128xf32, #tpu.memory_space<vmem>>, vector<2x1x128xf32>,
    } else {
    }
    %c0 = arith.constant 0 : index
    %c0_1 = arith.constant 0 : index
    %c0_2 = arith.constant 0 : index
    %c0_3 = arith.constant 0 : index
    %3 = vector.load %arg2[%c0, %c0_1, %c0_2, %c0_3] : memref<1x3x8x128xf32, #tpu.memory_space<vmem>>, vector<1x3x8x128xf32>
    %4 = vector.shape_cast %3 : vector<1x3x8x128xf32> to vector<3x8x128xf32>
    %c0_4 = arith.constant 0 : index
    %c0_5 = arith.constant 0 : index
    %c0_6 = arith.constant 0 : index
    %c0_7 = arith.constant 0 : index
    %5 = vector.load %arg3[%c0_4, %c0_5, %c0_6, %c0_7] : memref<1x3x8x128xf32, #tpu.memory_space<vmem>>, vector<1x3x8x128xf32>
    %6 = vector.shape_cast %5 : vector<1x3x8x128xf32> to vector<3x8x128xf32>
    %c0_8 = arith.constant 0 : index
    %c0_9 = arith.constant 0 : index
    %c0_10 = arith.constant 0 : index
    %c0_11 = arith.constant 0 : index
    %7 = vector.load %arg4[%c0_8, %c0_9, %c0_10, %c0_11] : memref<1x3x8x128xf32, #tpu.memory_space<vmem>>, vector<1x3x8x128xf32>
    %8 = vector.shape_cast %7 : vector<1x3x8x128xf32> to vector<3x8x128xf32>
    %c0_12 = arith.constant 0 : index
    %c0_13 = arith.constant 0 : index
    %c0_14 = arith.constant 0 : index
    %c0_15 = arith.constant 0 : index
    %9 = vector.load %arg5[%c0_12, %c0_13, %c0_14, %c0_15] : memref<1x3x8x128xf32, #tpu.memory_space<vmem>>, vector<1x3x8x128xf32>
    %10 = vector.shape_cast %9 : vector<1x3x8x128xf32> to vector<3x8x128xf32>
    %c0_16 = arith.constant 0 : index
    %c0_17 = arith.constant 0 : index
    %c0_18 = arith.constant 0 : index
    %c0_19 = arith.constant 0 : index
    %11 = vector.load %arg6[%c0_16, %c0_17, %c0_18, %c0_19] : memref<1x1x8x128xf32, #tpu.memory_space<vmem>>, vector<1x1x8x128xf32>
    %12 = vector.shape_cast %11 : vector<1x1x8x128xf32> to vector<8x128xf32>
    %c0_20 = arith.constant 0 : index
    %c0_21 = arith.constant 0 : index
    %c0_22 = arith.constant 0 : index
    %c0_23 = arith.constant 0 : index
    %13 = vector.load %arg7[%c0_20, %c0_21, %c0_22, %c0_23] : memref<1x1x8x128xf32, #tpu.memory_space<vmem>>, vector<1x1x8x128xf32>
    %14 = vector.shape_cast %13 : vector<1x1x8x128xf32> to vector<8x128xf32>
    %15 = arith.subf %8, %10 : vector<3x8x128xf32>
    %16 = arith.subf %8, %4 : vector<3x8x128xf32>
    %17 = arith.subf %10, %6 : vector<3x8x128xf32>
    %c0_24 = arith.constant 0 : index
    %c0_25 = arith.constant 0 : index
    %c0_26 = arith.constant 0 : index
    %c0_27 = arith.constant 0 : index
    %18 = vector.load %arg8[%c0_24, %c0_25, %c0_26, %c0_27] : memref<1x5x8x128xf32, #tpu.memory_space<vmem>>, vector<1x1x8x128xf32>
    %19 = vector.shape_cast %18 : vector<1x1x8x128xf32> to vector<8x128xf32>
    %20 = arith.mulf %15, %15 : vector<3x8x128xf32>
    %21 = arith.mulf %16, %16 : vector<3x8x128xf32>
    %22 = arith.addf %20, %21 : vector<3x8x128xf32>
    %23 = arith.mulf %17, %17 : vector<3x8x128xf32>
    %24 = arith.addf %22, %23 : vector<3x8x128xf32>
    %25 = vector.extract_strided_slice %24 {offsets = [0, 0, 0], sizes = [1, 8, 128], strides = [1, 1, 1]} : vector<3x8x128xf32> to vector<1x8x128xf32>
    %26 = vector.shape_cast %25 : vector<1x8x128xf32> to vector<8x128xf32>
    %27 = vector.extract_strided_slice %24 {offsets = [1, 0, 0], sizes = [1, 8, 128], strides = [1, 1, 1]} : vector<3x8x128xf32> to vector<1x8x128xf32>
    %28 = vector.shape_cast %27 : vector<1x8x128xf32> to vector<8x128xf32>
    %29 = arith.addf %26, %28 : vector<8x128xf32>
    %30 = vector.extract_strided_slice %24 {offsets = [2, 0, 0], sizes = [1, 8, 128], strides = [1, 1, 1]} : vector<3x8x128xf32> to vector<1x8x128xf32>
    %31 = vector.shape_cast %30 : vector<1x8x128xf32> to vector<8x128xf32>
    %32 = arith.addf %29, %31 : vector<8x128xf32>
    %33 = arith.addf %19, %32 : vector<8x128xf32>
    %c0_28 = arith.constant 0 : index
    %c0_29 = arith.constant 0 : index
    %c0_30 = arith.constant 0 : index
    %c0_31 = arith.constant 0 : index
    %34 = vector.load %arg8[%c0_28, %c0_29, %c0_30, %c0_31] : memref<1x5x8x128xf32, #tpu.memory_space<vmem>>, vector<1x1x8x128xf32>
    %35 = vector.shape_cast %34 : vector<1x1x8x128xf32> to vector<8x128xf32>
    %36 = vector.shape_cast %33 : vector<8x128xf32> to vector<1x1x8x128xf32>
    tpu.vector_store %arg8[%c0_28, %c0_29, %c0_30, %c0_31], %36 {strides = array<i32>} : memref<1x5x8x128xf32, #tpu.memory_space<vmem>>, vector<1x1x8x128xf32>,
    %37 = arith.subf %4, %6 : vector<3x8x128xf32>
    %c0_32 = arith.constant 0 : index
    %c1 = arith.constant 1 : index
    %c0_33 = arith.constant 0 : index
    %c0_34 = arith.constant 0 : index
    %38 = vector.load %arg8[%c0_32, %c1, %c0_33, %c0_34] : memref<1x5x8x128xf32, #tpu.memory_space<vmem>>, vector<1x1x8x128xf32>
    %39 = vector.shape_cast %38 : vector<1x1x8x128xf32> to vector<8x128xf32>
    %40 = arith.mulf %37, %37 : vector<3x8x128xf32>
    %41 = vector.extract_strided_slice %40 {offsets = [0, 0, 0], sizes = [1, 8, 128], strides = [1, 1, 1]} : vector<3x8x128xf32> to vector<1x8x128xf32>
    %42 = vector.shape_cast %41 : vector<1x8x128xf32> to vector<8x128xf32>
    %43 = vector.extract_strided_slice %40 {offsets = [1, 0, 0], sizes = [1, 8, 128], strides = [1, 1, 1]} : vector<3x8x128xf32> to vector<1x8x128xf32>
    %44 = vector.shape_cast %43 : vector<1x8x128xf32> to vector<8x128xf32>
    %45 = arith.addf %42, %44 : vector<8x128xf32>
    %46 = vector.extract_strided_slice %40 {offsets = [2, 0, 0], sizes = [1, 8, 128], strides = [1, 1, 1]} : vector<3x8x128xf32> to vector<1x8x128xf32>
    %47 = vector.shape_cast %46 : vector<1x8x128xf32> to vector<8x128xf32>
    %48 = arith.addf %45, %47 : vector<8x128xf32>
    %49 = arith.addf %39, %48 : vector<8x128xf32>
    %c0_35 = arith.constant 0 : index
    %c1_36 = arith.constant 1 : index
    %c0_37 = arith.constant 0 : index
    %c0_38 = arith.constant 0 : index
    %50 = vector.load %arg8[%c0_35, %c1_36, %c0_37, %c0_38] : memref<1x5x8x128xf32, #tpu.memory_space<vmem>>, vector<1x1x8x128xf32>
    %51 = vector.shape_cast %50 : vector<1x1x8x128xf32> to vector<8x128xf32>
    %52 = vector.shape_cast %49 : vector<8x128xf32> to vector<1x1x8x128xf32>
    tpu.vector_store %arg8[%c0_35, %c1_36, %c0_37, %c0_38], %52 {strides = array<i32>} : memref<1x5x8x128xf32, #tpu.memory_space<vmem>>, vector<1x1x8x128xf32>,
    %53 = vector.extract_strided_slice %4 {offsets = [0, 0, 0], sizes = [1, 8, 128], strides = [1, 1, 1]} : vector<3x8x128xf32> to vector<1x8x128xf32>
    %54 = vector.shape_cast %53 : vector<1x8x128xf32> to vector<8x128xf32>
    %cst = arith.constant 2.990000e-01 : f32
    %55 = vector.broadcast %cst : f32 to vector<8x128xf32>
    %56 = arith.mulf %55, %54 : vector<8x128xf32>
    %57 = vector.extract_strided_slice %4 {offsets = [1, 0, 0], sizes = [1, 8, 128], strides = [1, 1, 1]} : vector<3x8x128xf32> to vector<1x8x128xf32>
    %58 = vector.shape_cast %57 : vector<1x8x128xf32> to vector<8x128xf32>
    %cst_39 = arith.constant 5.870000e-01 : f32
    %59 = vector.broadcast %cst_39 : f32 to vector<8x128xf32>
    %60 = arith.mulf %59, %58 : vector<8x128xf32>
    %61 = arith.addf %56, %60 : vector<8x128xf32>
    %62 = vector.extract_strided_slice %4 {offsets = [2, 0, 0], sizes = [1, 8, 128], strides = [1, 1, 1]} : vector<3x8x128xf32> to vector<1x8x128xf32>
    %63 = vector.shape_cast %62 : vector<1x8x128xf32> to vector<8x128xf32>
    %cst_40 = arith.constant 1.140000e-01 : f32
    %64 = vector.broadcast %cst_40 : f32 to vector<8x128xf32>
    %65 = arith.mulf %64, %63 : vector<8x128xf32>
    %66 = arith.addf %61, %65 : vector<8x128xf32>
    %67 = vector.extract_strided_slice %6 {offsets = [0, 0, 0], sizes = [1, 8, 128], strides = [1, 1, 1]} : vector<3x8x128xf32> to vector<1x8x128xf32>
    %68 = vector.shape_cast %67 : vector<1x8x128xf32> to vector<8x128xf32>
    %cst_41 = arith.constant 2.990000e-01 : f32
    %69 = vector.broadcast %cst_41 : f32 to vector<8x128xf32>
    %70 = arith.mulf %69, %68 : vector<8x128xf32>
    %71 = vector.extract_strided_slice %6 {offsets = [1, 0, 0], sizes = [1, 8, 128], strides = [1, 1, 1]} : vector<3x8x128xf32> to vector<1x8x128xf32>
    %72 = vector.shape_cast %71 : vector<1x8x128xf32> to vector<8x128xf32>
    %cst_42 = arith.constant 5.870000e-01 : f32
    %73 = vector.broadcast %cst_42 : f32 to vector<8x128xf32>
    %74 = arith.mulf %73, %72 : vector<8x128xf32>
    %75 = arith.addf %70, %74 : vector<8x128xf32>
    %76 = vector.extract_strided_slice %6 {offsets = [2, 0, 0], sizes = [1, 8, 128], strides = [1, 1, 1]} : vector<3x8x128xf32> to vector<1x8x128xf32>
    %77 = vector.shape_cast %76 : vector<1x8x128xf32> to vector<8x128xf32>
    %cst_43 = arith.constant 1.140000e-01 : f32
    %78 = vector.broadcast %cst_43 : f32 to vector<8x128xf32>
    %79 = arith.mulf %78, %77 : vector<8x128xf32>
    %80 = arith.addf %75, %79 : vector<8x128xf32>
    %81 = vector.extract_strided_slice %8 {offsets = [0, 0, 0], sizes = [1, 8, 128], strides = [1, 1, 1]} : vector<3x8x128xf32> to vector<1x8x128xf32>
    %82 = vector.shape_cast %81 : vector<1x8x128xf32> to vector<8x128xf32>
    %cst_44 = arith.constant 2.990000e-01 : f32
    %83 = vector.broadcast %cst_44 : f32 to vector<8x128xf32>
    %84 = arith.mulf %83, %82 : vector<8x128xf32>
    %85 = vector.extract_strided_slice %8 {offsets = [1, 0, 0], sizes = [1, 8, 128], strides = [1, 1, 1]} : vector<3x8x128xf32> to vector<1x8x128xf32>
    %86 = vector.shape_cast %85 : vector<1x8x128xf32> to vector<8x128xf32>
    %cst_45 = arith.constant 5.870000e-01 : f32
    %87 = vector.broadcast %cst_45 : f32 to vector<8x128xf32>
    %88 = arith.mulf %87, %86 : vector<8x128xf32>
    %89 = arith.addf %84, %88 : vector<8x128xf32>
    %90 = vector.extract_strided_slice %8 {offsets = [2, 0, 0], sizes = [1, 8, 128], strides = [1, 1, 1]} : vector<3x8x128xf32> to vector<1x8x128xf32>
    %91 = vector.shape_cast %90 : vector<1x8x128xf32> to vector<8x128xf32>
    %cst_46 = arith.constant 1.140000e-01 : f32
    %92 = vector.broadcast %cst_46 : f32 to vector<8x128xf32>
    %93 = arith.mulf %92, %91 : vector<8x128xf32>
    %94 = arith.addf %89, %93 : vector<8x128xf32>
    %95 = vector.extract_strided_slice %10 {offsets = [0, 0, 0], sizes = [1, 8, 128], strides = [1, 1, 1]} : vector<3x8x128xf32> to vector<1x8x128xf32>
    %96 = vector.shape_cast %95 : vector<1x8x128xf32> to vector<8x128xf32>
    %cst_47 = arith.constant 2.990000e-01 : f32
    %97 = vector.broadcast %cst_47 : f32 to vector<8x128xf32>
    %98 = arith.mulf %97, %96 : vector<8x128xf32>
    %99 = vector.extract_strided_slice %10 {offsets = [1, 0, 0], sizes = [1, 8, 128], strides = [1, 1, 1]} : vector<3x8x128xf32> to vector<1x8x128xf32>
    %100 = vector.shape_cast %99 : vector<1x8x128xf32> to vector<8x128xf32>
    %cst_48 = arith.constant 5.870000e-01 : f32
    %101 = vector.broadcast %cst_48 : f32 to vector<8x128xf32>
    %102 = arith.mulf %101, %100 : vector<8x128xf32>
    %103 = arith.addf %98, %102 : vector<8x128xf32>
    %104 = vector.extract_strided_slice %10 {offsets = [2, 0, 0], sizes = [1, 8, 128], strides = [1, 1, 1]} : vector<3x8x128xf32> to vector<1x8x128xf32>
    %105 = vector.shape_cast %104 : vector<1x8x128xf32> to vector<8x128xf32>
    %cst_49 = arith.constant 1.140000e-01 : f32
    %106 = vector.broadcast %cst_49 : f32 to vector<8x128xf32>
    %107 = arith.mulf %106, %105 : vector<8x128xf32>
    %108 = arith.addf %103, %107 : vector<8x128xf32>
    %c0_50 = arith.constant 0 : index
    %c2 = arith.constant 2 : index
    %c0_51 = arith.constant 0 : index
    %c0_52 = arith.constant 0 : index
    %109 = vector.load %arg8[%c0_50, %c2, %c0_51, %c0_52] : memref<1x5x8x128xf32, #tpu.memory_space<vmem>>, vector<1x1x8x128xf32>
    %110 = vector.shape_cast %109 : vector<1x1x8x128xf32> to vector<8x128xf32>
    %cst_53 = arith.constant 1.500000e+00 : f32
    %111 = vector.broadcast %cst_53 : f32 to vector<8x128xf32>
    %112 = arith.mulf %111, %12 : vector<8x128xf32>
    %113 = math.exp %112 : vector<8x128xf32>
    %cst_54 = arith.constant 2.000000e+00 : f32
    %114 = vector.broadcast %cst_54 : f32 to vector<8x128xf32>
    %115 = arith.subf %113, %114 : vector<8x128xf32>
    %cst_55 = arith.constant 1.500000e+00 : f32
    %116 = vector.broadcast %cst_55 : f32 to vector<8x128xf32>
    %117 = arith.mulf %116, %66 : vector<8x128xf32>
    %118 = math.exp %117 : vector<8x128xf32>
    %cst_56 = arith.constant 2.000000e+00 : f32
    %119 = vector.broadcast %cst_56 : f32 to vector<8x128xf32>
    %120 = arith.subf %118, %119 : vector<8x128xf32>
    %121 = arith.mulf %115, %120 : vector<8x128xf32>
    %cst_57 = arith.constant 1.000000e+00 : f32
    %122 = vector.broadcast %cst_57 : f32 to vector<8x128xf32>
    %123 = arith.addf %121, %122 : vector<8x128xf32>
    %cst_58 = arith.constant 0.000000e+00 : f32
    %cst_59 = arith.constant 5.000000e+00 : f32
    %124 = vector.broadcast %cst_58 : f32 to vector<8x128xf32>
    %125 = arith.maximumf %124, %123 : vector<8x128xf32>
    %126 = vector.broadcast %cst_59 : f32 to vector<8x128xf32>
    %127 = arith.minimumf %126, %125 : vector<8x128xf32>
    %cst_60 = arith.constant 1.500000e+00 : f32
    %128 = vector.broadcast %cst_60 : f32 to vector<8x128xf32>
    %129 = arith.mulf %128, %14 : vector<8x128xf32>
    %130 = math.exp %129 : vector<8x128xf32>
    %cst_61 = arith.constant 2.000000e+00 : f32
    %131 = vector.broadcast %cst_61 : f32 to vector<8x128xf32>
    %132 = arith.subf %130, %131 : vector<8x128xf32>
    %cst_62 = arith.constant 1.500000e+00 : f32
    %133 = vector.broadcast %cst_62 : f32 to vector<8x128xf32>
    %134 = arith.mulf %133, %80 : vector<8x128xf32>
    %135 = math.exp %134 : vector<8x128xf32>
    %cst_63 = arith.constant 2.000000e+00 : f32
    %136 = vector.broadcast %cst_63 : f32 to vector<8x128xf32>
    %137 = arith.subf %135, %136 : vector<8x128xf32>
    %138 = arith.mulf %132, %137 : vector<8x128xf32>
    %cst_64 = arith.constant 1.000000e+00 : f32
    %139 = vector.broadcast %cst_64 : f32 to vector<8x128xf32>
    %140 = arith.addf %138, %139 : vector<8x128xf32>
    %cst_65 = arith.constant 0.000000e+00 : f32
    %cst_66 = arith.constant 5.000000e+00 : f32
    %141 = vector.broadcast %cst_65 : f32 to vector<8x128xf32>
    %142 = arith.maximumf %141, %140 : vector<8x128xf32>
    %143 = vector.broadcast %cst_66 : f32 to vector<8x128xf32>
    %144 = arith.minimumf %143, %142 : vector<8x128xf32>
    %145 = arith.addf %127, %144 : vector<8x128xf32>
    %146 = arith.addf %110, %145 : vector<8x128xf32>
    %c0_67 = arith.constant 0 : index
    %c2_68 = arith.constant 2 : index
    %c0_69 = arith.constant 0 : index
    %c0_70 = arith.constant 0 : index
    %147 = vector.load %arg8[%c0_67, %c2_68, %c0_69, %c0_70] : memref<1x5x8x128xf32, #tpu.memory_space<vmem>>, vector<1x1x8x128xf32>
    %148 = vector.shape_cast %147 : vector<1x1x8x128xf32> to vector<8x128xf32>
    %149 = vector.shape_cast %146 : vector<8x128xf32> to vector<1x1x8x128xf32>
    tpu.vector_store %arg8[%c0_67, %c2_68, %c0_69, %c0_70], %149 {strides = array<i32>} : memref<1x5x8x128xf32, #tpu.memory_space<vmem>>, vector<1x1x8x128xf32>,
    %150 = tpu.iota {dimensions = array<i32: 1>} : vector<8x128xi32>
    %c0_i32_71 = arith.constant 0 : i32
    %151 = vector.broadcast %c0_i32_71 : i32 to vector<8x128xi32>
    %152 = arith.cmpi eq, %150, %151 : vector<8x128xi32>
    %153 = tpu.iota {dimensions = array<i32: 0>} : vector<8x128xi32>
    %c0_i32_72 = arith.constant 0 : i32
    %154 = vector.broadcast %c0_i32_72 : i32 to vector<8x128xi32>
    %155 = arith.cmpi eq, %153, %154 : vector<8x128xi32>
    %c1_i32 = arith.constant 1 : i32
    %156 = tpu.dynamic_rotate %94 by %c1_i32 dim 1 : vector<8x128xf32>, i32 -> vector<8x128xf32>
    %157 = arith.subf %156, %94 : vector<8x128xf32>
    %158 = math.absf %157 : vector<8x128xf32>
    %159 = vector.extract_strided_slice %94 {offsets = [0, 0], sizes = [8, 1], strides = [1, 1]} : vector<8x128xf32> to vector<8x1xf32>
    %160 = vector.extract_strided_slice %94 {offsets = [0, 127], sizes = [8, 1], strides = [1, 1]} : vector<8x128xf32> to vector<8x1xf32>
    %161 = arith.subf %159, %160 : vector<8x1xf32>
    %162 = math.absf %161 : vector<8x1xf32>
    %cst_73 = arith.constant -1.000000e+01 : f32
    %163 = vector.broadcast %cst_73 : f32 to vector<8x1xf32>
    %164 = arith.mulf %163, %162 : vector<8x1xf32>
    %165 = math.exp %164 : vector<8x1xf32>
    %166 = arith.mulf %162, %165 : vector<8x1xf32>
    %cst_74 = arith.constant -1.000000e+01 : f32
    %167 = vector.broadcast %cst_74 : f32 to vector<8x128xf32>
    %168 = arith.mulf %167, %158 : vector<8x128xf32>
    %169 = math.exp %168 : vector<8x128xf32>
    %170 = arith.mulf %158, %169 : vector<8x128xf32>
    %cst_75 = arith.constant 0.000000e+00 : f32
    %171 = vector.shape_cast %166 : vector<8x1xf32> to vector<8x1xf32>
    %172 = vector.broadcast %171 : vector<8x1xf32> to vector<8x128xf32>
    %173 = vector.broadcast %cst_75 : f32 to vector<8x128xf32>
    %174 = arith.select %152, %172, %173 : vector<8x128xi1>, vector<8x128xf32>
    %175 = arith.subf %170, %174 : vector<8x128xf32>
    %c1_i32_76 = arith.constant 1 : i32
    %176 = tpu.dynamic_rotate %94 by %c1_i32_76 dim 0 : vector<8x128xf32>, i32 -> vector<8x128xf32>
    %177 = arith.subf %176, %94 : vector<8x128xf32>
    %178 = math.absf %177 : vector<8x128xf32>
    %179 = vector.extract_strided_slice %94 {offsets = [0, 0], sizes = [1, 128], strides = [1, 1]} : vector<8x128xf32> to vector<1x128xf32>
    %180 = vector.extract_strided_slice %94 {offsets = [7, 0], sizes = [1, 128], strides = [1, 1]} : vector<8x128xf32> to vector<1x128xf32>
    %181 = arith.subf %179, %180 : vector<1x128xf32>
    %182 = math.absf %181 : vector<1x128xf32>
    %cst_77 = arith.constant -1.000000e+01 : f32
    %183 = vector.broadcast %cst_77 : f32 to vector<1x128xf32>
    %184 = arith.mulf %183, %182 : vector<1x128xf32>
    %185 = math.exp %184 : vector<1x128xf32>
    %186 = arith.mulf %182, %185 : vector<1x128xf32>
    %187 = vector.extract_strided_slice %94 {offsets = [0, 0], sizes = [1, 128], strides = [1, 1]} : vector<8x128xf32> to vector<1x128xf32>
    %c0_78 = arith.constant 0 : index
    %c0_79 = arith.constant 0 : index
    %c0_80 = arith.constant 0 : index
    %188 = vector.load %arg9[%c0_78, %c0_79, %c0_80] : memref<2x1x128xf32, #tpu.memory_space<vmem>>, vector<1x1x128xf32>
    %189 = vector.shape_cast %188 : vector<1x1x128xf32> to vector<1x128xf32>
    %190 = arith.subf %187, %189 : vector<1x128xf32>
    %191 = math.absf %190 : vector<1x128xf32>
    %c0_i32_81 = arith.constant 0 : i32
    %192 = arith.cmpi sgt, %arg1, %c0_i32_81 : i32
    %cst_82 = arith.constant -1.000000e+01 : f32
    %193 = vector.broadcast %cst_82 : f32 to vector<1x128xf32>
    %194 = arith.mulf %193, %191 : vector<1x128xf32>
    %195 = math.exp %194 : vector<1x128xf32>
    %196 = arith.mulf %191, %195 : vector<1x128xf32>
    %cst_83 = arith.constant 0.000000e+00 : f32
    %197 = vector.broadcast %cst_83 : f32 to vector<1x128xf32>
    %198 = arith.select %192, %196, %197 : vector<1x128xf32>
    %cst_84 = arith.constant -1.000000e+01 : f32
    %199 = vector.broadcast %cst_84 : f32 to vector<8x128xf32>
    %200 = arith.mulf %199, %178 : vector<8x128xf32>
    %201 = math.exp %200 : vector<8x128xf32>
    %202 = arith.mulf %178, %201 : vector<8x128xf32>
    %203 = arith.subf %198, %186 : vector<1x128xf32>
    %cst_85 = arith.constant 0.000000e+00 : f32
    %204 = vector.shape_cast %203 : vector<1x128xf32> to vector<1x128xf32>
    %205 = vector.broadcast %204 : vector<1x128xf32> to vector<8x128xf32>
    %206 = vector.broadcast %cst_85 : f32 to vector<8x128xf32>
    %207 = arith.select %155, %205, %206 : vector<8x128xi1>, vector<8x128xf32>
    %208 = arith.addf %202, %207 : vector<8x128xf32>
    %209 = vector.extract_strided_slice %94 {offsets = [7, 0], sizes = [1, 128], strides = [1, 1]} : vector<8x128xf32> to vector<1x128xf32>
    %c0_86 = arith.constant 0 : index
    %c0_87 = arith.constant 0 : index
    %c0_88 = arith.constant 0 : index
    %210 = vector.load %arg9[%c0_86, %c0_87, %c0_88] : memref<2x1x128xf32, #tpu.memory_space<vmem>>, vector<1x1x128xf32>
    %211 = vector.shape_cast %210 : vector<1x1x128xf32> to vector<1x128xf32>
    %212 = vector.shape_cast %209 : vector<1x128xf32> to vector<1x1x128xf32>
    tpu.vector_store %arg9[%c0_86, %c0_87, %c0_88], %212 {strides = array<i32>} : memref<2x1x128xf32, #tpu.memory_space<vmem>>, vector<1x1x128xf32>,
    %c1_i32_89 = arith.constant 1 : i32
    %213 = tpu.dynamic_rotate %108 by %c1_i32_89 dim 1 : vector<8x128xf32>, i32 -> vector<8x128xf32>
    %214 = arith.subf %213, %108 : vector<8x128xf32>
    %215 = math.absf %214 : vector<8x128xf32>
    %216 = vector.extract_strided_slice %108 {offsets = [0, 0], sizes = [8, 1], strides = [1, 1]} : vector<8x128xf32> to vector<8x1xf32>
    %217 = vector.extract_strided_slice %108 {offsets = [0, 127], sizes = [8, 1], strides = [1, 1]} : vector<8x128xf32> to vector<8x1xf32>
    %218 = arith.subf %216, %217 : vector<8x1xf32>
    %219 = math.absf %218 : vector<8x1xf32>
    %cst_90 = arith.constant -1.000000e+01 : f32
    %220 = vector.broadcast %cst_90 : f32 to vector<8x1xf32>
    %221 = arith.mulf %220, %219 : vector<8x1xf32>
    %222 = math.exp %221 : vector<8x1xf32>
    %223 = arith.mulf %219, %222 : vector<8x1xf32>
    %cst_91 = arith.constant -1.000000e+01 : f32
    %224 = vector.broadcast %cst_91 : f32 to vector<8x128xf32>
    %225 = arith.mulf %224, %215 : vector<8x128xf32>
    %226 = math.exp %225 : vector<8x128xf32>
    %227 = arith.mulf %215, %226 : vector<8x128xf32>
    %cst_92 = arith.constant 0.000000e+00 : f32
    %228 = vector.shape_cast %223 : vector<8x1xf32> to vector<8x1xf32>
    %229 = vector.broadcast %228 : vector<8x1xf32> to vector<8x128xf32>
    %230 = vector.broadcast %cst_92 : f32 to vector<8x128xf32>
    %231 = arith.select %152, %229, %230 : vector<8x128xi1>, vector<8x128xf32>
    %232 = arith.subf %227, %231 : vector<8x128xf32>
    %c1_i32_93 = arith.constant 1 : i32
    %233 = tpu.dynamic_rotate %108 by %c1_i32_93 dim 0 : vector<8x128xf32>, i32 -> vector<8x128xf32>
    %234 = arith.subf %233, %108 : vector<8x128xf32>
    %235 = math.absf %234 : vector<8x128xf32>
    %236 = vector.extract_strided_slice %108 {offsets = [0, 0], sizes = [1, 128], strides = [1, 1]} : vector<8x128xf32> to vector<1x128xf32>
    %237 = vector.extract_strided_slice %108 {offsets = [7, 0], sizes = [1, 128], strides = [1, 1]} : vector<8x128xf32> to vector<1x128xf32>
    %238 = arith.subf %236, %237 : vector<1x128xf32>
    %239 = math.absf %238 : vector<1x128xf32>
    %cst_94 = arith.constant -1.000000e+01 : f32
    %240 = vector.broadcast %cst_94 : f32 to vector<1x128xf32>
    %241 = arith.mulf %240, %239 : vector<1x128xf32>
    %242 = math.exp %241 : vector<1x128xf32>
    %243 = arith.mulf %239, %242 : vector<1x128xf32>
    %244 = vector.extract_strided_slice %108 {offsets = [0, 0], sizes = [1, 128], strides = [1, 1]} : vector<8x128xf32> to vector<1x128xf32>
    %c1_95 = arith.constant 1 : index
    %c0_96 = arith.constant 0 : index
    %c0_97 = arith.constant 0 : index
    %245 = vector.load %arg9[%c1_95, %c0_96, %c0_97] : memref<2x1x128xf32, #tpu.memory_space<vmem>>, vector<1x1x128xf32>
    %246 = vector.shape_cast %245 : vector<1x1x128xf32> to vector<1x128xf32>
    %247 = arith.subf %244, %246 : vector<1x128xf32>
    %248 = math.absf %247 : vector<1x128xf32>
    %c0_i32_98 = arith.constant 0 : i32
    %249 = arith.cmpi sgt, %arg1, %c0_i32_98 : i32
    %cst_99 = arith.constant -1.000000e+01 : f32
    %250 = vector.broadcast %cst_99 : f32 to vector<1x128xf32>
    %251 = arith.mulf %250, %248 : vector<1x128xf32>
    %252 = math.exp %251 : vector<1x128xf32>
    %253 = arith.mulf %248, %252 : vector<1x128xf32>
    %cst_100 = arith.constant 0.000000e+00 : f32
    %254 = vector.broadcast %cst_100 : f32 to vector<1x128xf32>
    %255 = arith.select %249, %253, %254 : vector<1x128xf32>
    %cst_101 = arith.constant -1.000000e+01 : f32
    %256 = vector.broadcast %cst_101 : f32 to vector<8x128xf32>
    %257 = arith.mulf %256, %235 : vector<8x128xf32>
    %258 = math.exp %257 : vector<8x128xf32>
    %259 = arith.mulf %235, %258 : vector<8x128xf32>
    %260 = arith.subf %255, %243 : vector<1x128xf32>
    %cst_102 = arith.constant 0.000000e+00 : f32
    %261 = vector.shape_cast %260 : vector<1x128xf32> to vector<1x128xf32>
    %262 = vector.broadcast %261 : vector<1x128xf32> to vector<8x128xf32>
    %263 = vector.broadcast %cst_102 : f32 to vector<8x128xf32>
    %264 = arith.select %155, %262, %263 : vector<8x128xi1>, vector<8x128xf32>
    %265 = arith.addf %259, %264 : vector<8x128xf32>
    %266 = vector.extract_strided_slice %108 {offsets = [7, 0], sizes = [1, 128], strides = [1, 1]} : vector<8x128xf32> to vector<1x128xf32>
    %c1_103 = arith.constant 1 : index
    %c0_104 = arith.constant 0 : index
    %c0_105 = arith.constant 0 : index
    %267 = vector.load %arg9[%c1_103, %c0_104, %c0_105] : memref<2x1x128xf32, #tpu.memory_space<vmem>>, vector<1x1x128xf32>
    %268 = vector.shape_cast %267 : vector<1x1x128xf32> to vector<1x128xf32>
    %269 = vector.shape_cast %266 : vector<1x128xf32> to vector<1x1x128xf32>
    tpu.vector_store %arg9[%c1_103, %c0_104, %c0_105], %269 {strides = array<i32>} : memref<2x1x128xf32, #tpu.memory_space<vmem>>, vector<1x1x128xf32>,
    %c0_106 = arith.constant 0 : index
    %c3 = arith.constant 3 : index
    %c0_107 = arith.constant 0 : index
    %c0_108 = arith.constant 0 : index
    %270 = vector.load %arg8[%c0_106, %c3, %c0_107, %c0_108] : memref<1x5x8x128xf32, #tpu.memory_space<vmem>>, vector<1x1x8x128xf32>
    %271 = vector.shape_cast %270 : vector<1x1x8x128xf32> to vector<8x128xf32>
    %272 = arith.addf %175, %232 : vector<8x128xf32>
    %273 = arith.addf %271, %272 : vector<8x128xf32>
    %c0_109 = arith.constant 0 : index
    %c3_110 = arith.constant 3 : index
    %c0_111 = arith.constant 0 : index
    %c0_112 = arith.constant 0 : index
    %274 = vector.load %arg8[%c0_109, %c3_110, %c0_111, %c0_112] : memref<1x5x8x128xf32, #tpu.memory_space<vmem>>, vector<1x1x8x128xf32>
    %275 = vector.shape_cast %274 : vector<1x1x8x128xf32> to vector<8x128xf32>
    %276 = vector.shape_cast %273 : vector<8x128xf32> to vector<1x1x8x128xf32>
    tpu.vector_store %arg8[%c0_109, %c3_110, %c0_111, %c0_112], %276 {strides = array<i32>} : memref<1x5x8x128xf32, #tpu.memory_space<vmem>>, vector<1x1x8x128xf32>,
    %c0_113 = arith.constant 0 : index
    %c4 = arith.constant 4 : index
    %c0_114 = arith.constant 0 : index
    %c0_115 = arith.constant 0 : index
    %277 = vector.load %arg8[%c0_113, %c4, %c0_114, %c0_115] : memref<1x5x8x128xf32, #tpu.memory_space<vmem>>, vector<1x1x8x128xf32>
    %278 = vector.shape_cast %277 : vector<1x1x8x128xf32> to vector<8x128xf32>
    %279 = arith.addf %208, %265 : vector<8x128xf32>
    %280 = arith.addf %278, %279 : vector<8x128xf32>
    %c0_116 = arith.constant 0 : index
    %c4_117 = arith.constant 4 : index
    %c0_118 = arith.constant 0 : index
    %c0_119 = arith.constant 0 : index
    %281 = vector.load %arg8[%c0_116, %c4_117, %c0_118, %c0_119] : memref<1x5x8x128xf32, #tpu.memory_space<vmem>>, vector<1x1x8x128xf32>
    %282 = vector.shape_cast %281 : vector<1x1x8x128xf32> to vector<8x128xf32>
    %283 = vector.shape_cast %280 : vector<8x128xf32> to vector<1x1x8x128xf32>
    tpu.vector_store %arg8[%c0_116, %c4_117, %c0_118, %c0_119], %283 {strides = array<i32>} : memref<1x5x8x128xf32, #tpu.memory_space<vmem>>, vector<1x1x8x128xf32>,
    return
  }
  func.func @transform_0(%arg0: i32, %arg1: i32) -> (i32, i32, i32, i32) {
    %c0_i32 = arith.constant 0 : i32
    %c0_i32_0 = arith.constant 0 : i32
    %c0_i32_1 = arith.constant 0 : i32
    return %arg0, %c0_i32, %arg1, %c0_i32_0 : i32, i32, i32, i32
  }
  func.func @transform_1(%arg0: i32, %arg1: i32) -> (i32, i32, i32, i32) {
    %c0_i32 = arith.constant 0 : i32
    %c0_i32_0 = arith.constant 0 : i32
    %c0_i32_1 = arith.constant 0 : i32
    return %arg0, %c0_i32, %arg1, %c0_i32_0 : i32, i32, i32, i32
  }
  func.func @transform_2(%arg0: i32, %arg1: i32) -> (i32, i32, i32, i32) {
    %c0_i32 = arith.constant 0 : i32
    %c0_i32_0 = arith.constant 0 : i32
    %c0_i32_1 = arith.constant 0 : i32
    return %arg0, %c0_i32, %arg1, %c0_i32_0 : i32, i32, i32, i32
  }
  func.func @transform_3(%arg0: i32, %arg1: i32) -> (i32, i32, i32, i32) {
    %c0_i32 = arith.constant 0 : i32
    %c0_i32_0 = arith.constant 0 : i32
    %c0_i32_1 = arith.constant 0 : i32
    return %arg0, %c0_i32, %arg1, %c0_i32_0 : i32, i32, i32, i32
  }
  func.func @transform_4(%arg0: i32, %arg1: i32) -> (i32, i32, i32, i32) {
    %c0_i32 = arith.constant 0 : i32
    %c0_i32_0 = arith.constant 0 : i32
    %c0_i32_1 = arith.constant 0 : i32
    return %arg0, %c0_i32, %arg1, %c0_i32_0 : i32, i32, i32, i32
  }
  func.func @transform_5(%arg0: i32, %arg1: i32) -> (i32, i32, i32, i32) {
    %c0_i32 = arith.constant 0 : i32
    %c0_i32_0 = arith.constant 0 : i32
    %c0_i32_1 = arith.constant 0 : i32
    return %arg0, %c0_i32, %arg1, %c0_i32_0 : i32, i32, i32, i32
  }
  func.func @transform_6(%arg0: i32, %arg1: i32) -> (i32, i32, i32, i32) {
    %c0_i32 = arith.constant 0 : i32
    %c0_i32_0 = arith.constant 0 : i32
    %c0_i32_1 = arith.constant 0 : i32
    %c0_i32_2 = arith.constant 0 : i32
    return %arg0, %c0_i32, %c0_i32_0, %c0_i32_1 : i32, i32, i32, i32
  }
}

</mosaic_0001>

<llo_original>
// kernel: tpu_custom_call.1
$region0: #{tpu_custom_call.1}
  #allocation0 [shape = 'u32[]', space=smem, size = 0x4, offset = 0x4, fixed_abs, tag = 'smem constant byte address 0x4 - core index']
  #allocation1 [shape = 'u32[144,128]{1,0:T(1,128)}', space=vmem, size = 0x12000, scoped, tag = 'internal scratch']
  #allocation2 [shape = 'f32[2,1,128]{2,1,0:T(1,128)}', space=vmem, size = 0x400, scoped, tag = 'scratch operand']
  %s0 = inlined_call_operand.hbm [shape: f32[2,3,16,128], index: 0, kind: input, shape index: {}]
  %s1 = inlined_call_operand.hbm [shape: f32[2,3,16,128], index: 1, kind: input, shape index: {}]
  %s2 = inlined_call_operand.hbm [shape: f32[2,3,16,128], index: 2, kind: input, shape index: {}]
  %s3 = inlined_call_operand.hbm [shape: f32[2,3,16,128], index: 3, kind: input, shape index: {}]
  %s4 = inlined_call_operand.hbm [shape: f32[2,1,16,128], index: 4, kind: input, shape index: {}]
  %s5 = inlined_call_operand.hbm [shape: f32[2,1,16,128], index: 5, kind: input, shape index: {}]
  %s6 = inlined_call_operand.hbm [shape: f32[2,5,8,128], index: 6, kind: output, shape index: {}]
  %s7 = sld [smem:[#allocation0]]
  $region85: #{tpu_custom_call.1} parent=0
    _
  %s9 = ssub.s32 1, %s7
  %s10 = scalar_select 0, %s9, %s7
  $region1: #{tpu_custom_call.1} parent=0
    #allocation3 [shape = 'u8[24576]{0}', space=vmem, size = 0x6000, scoped, tag = 'input window, operand 0']
    #allocation4 [shape = 's32[2]{0}', space=sflag, size = 0x8, scoped, tag = 'scoped memory for tpu_custom_call.1']
    #allocation5 [shape = 's32[2]{0}', space=sflag, size = 0x8, scoped, tag = 'scoped memory for tpu_custom_call.1']
    #allocation6 [shape = 'u8[24576]{0}', space=vmem, size = 0x6000, scoped, tag = 'input window, operand 1']
    #allocation7 [shape = 's32[2]{0}', space=sflag, size = 0x8, scoped, tag = 'scoped memory for tpu_custom_call.1']
    #allocation8 [shape = 'u8[24576]{0}', space=vmem, size = 0x6000, scoped, tag = 'input window, operand 2']
    #allocation9 [shape = 'u8[24576]{0}', space=vmem, size = 0x6000, scoped, tag = 'input window, operand 3']
    #allocation10 [shape = 's32[2]{0}', space=sflag, size = 0x8, scoped, tag = 'scoped memory for tpu_custom_call.1']
    #allocation11 [shape = 'u8[8192]{0}', space=vmem, size = 0x2000, scoped, tag = 'input window, operand 4']
    #allocation12 [shape = 'u8[8192]{0}', space=vmem, size = 0x2000, scoped, tag = 'input window, operand 5']
    #allocation13 [shape = 's32[2]{0}', space=sflag, size = 0x8, scoped, tag = 'scoped memory for tpu_custom_call.1']
    #allocation14 [shape = 'u8[40960]{0}', space=vmem, size = 0xa000, scoped, tag = 'output window, operand 0']
    %11 = vsyncpa [#allocation4], 0
    %s12 = scalar_lea.sflag [#allocation4], 1
    %13 = vsyncpa %s12, 0
    %14 = vsyncpa [#allocation7], 0
    %s15 = scalar_lea.sflag [#allocation7], 1
    %16 = vsyncpa %s15, 0
    %17 = vsyncpa [#allocation10], 0
    %s18 = scalar_lea.sflag [#allocation10], 1
    %19 = vsyncpa %s18, 0
    %20 = vsyncpa [#allocation13], 0
    %s21 = scalar_lea.sflag [#allocation13], 1
    %22 = vsyncpa %s21, 0
    %23 = vsyncpa [#allocation5], 0
    %s24 = scalar_lea.sflag [#allocation5], 1
    %25 = vsyncpa %s24, 0
    loop: start=0, step=1, limit=6
    $region2: #{tpu_custom_call.1} parent=1 // loop_pre_header
      _
    $region3: #{tpu_custom_call.1} parent=1 // loop_header
      %s27 = sphi 0, %s31
      %p28 = scmp.ge.s32.totalorder %s27, 6
      %s34 = sphi 0, %s46
      %s35 = sphi 0, %s42
      %s36 = sphi 0, %s34
      %s37 = sphi 0, %s35
      %s38 = sphi 0, %s36
      %s39 = sphi 0, %s37
      %s51 = sphi 0, %s53
      %s54 = sphi 0, %s51
      %s55 = sphi 0, %s54
      %s71 = sphi 0, %s55
      %s79 = sphi 0, %s81
      %s82 = sphi 0, %s79
      %s83 = sphi 0, %s82
      %s99 = sphi 0, %s83
      %s107 = sphi 0, %s109
      %s110 = sphi 0, %s107
      %s111 = sphi 0, %s110
      %s127 = sphi 0, %s111
      %s135 = sphi 0, %s137
      %s138 = sphi 0, %s135
      %s139 = sphi 0, %s138
      %s155 = sphi 0, %s139
      %s163 = sphi 0, %s165
      %s166 = sphi 0, %s163
      %s167 = sphi 0, %s166
      %s183 = sphi 0, %s167
      %s191 = sphi 0, %s193
      %s194 = sphi 0, %s191
      %s195 = sphi 0, %s194
      %s211 = sphi 0, %s195
      %s217 = sphi 0, %s219
      %s220 = sphi 0, %s217
      %s221 = sphi 0, %s220
      %s237 = sphi 0, %s221
    $region4: #{tpu_custom_call.1} parent=1 // loop_header_branch
      %30 = sbr.rel (%p28) target = $region8
    $region5: #{tpu_custom_call.1} parent=1 // loop_body
      %s32 = ssub.s32 %s27, 1
      %s33 = ssub.s32 %s27, 2
      %s40 = sadd.s32 1, %s35
      %p41 = scmp.ge.s32.totalorder %s40, 2
      %s42 = scalar_select %p41, 0, %s40
      %s43 = sadd.s32 1, %s34
      %s44 = scalar_select %p41, %s43, %s34
      %p45 = scmp.ge.s32.totalorder %s44, 2
      %s46 = scalar_select %p45, 0, %s44
      %s47 = ssub.s32 %s34, %s46
      %s48 = ssub.s32 %s35, %s42
      %s49 = sor.u32 %s47, %s48
      %p50 = scmp.eq.s32.totalorder %s49, 0
      %s52 = sadd.s32 %s51, 1
      %s53 = scalar_select %p50, %s51, %s52
      %p56 = pneg %p50
      %p57 = scmp.eq.s32.totalorder %s27, 3
      %p58 = por %p56, %p57
      %p59 = scmp.ne.s32.totalorder %s51, %s54
      %p60 = scmp.eq.s32.totalorder %s27, 0
      %p61 = por %p59, %p60
      %p62 = scmp.ne.s32.totalorder %s51, %s54
      %p63 = scmp.eq.s32.totalorder %s32, 3
      %p64 = por %p62, %p63
      %p65 = scmp.ne.s32.totalorder %s54, %s55
      %p66 = scmp.eq.s32.totalorder %s32, 0
      %p67 = por %p65, %p66
      %p68 = scmp.ne.s32.totalorder %s54, %s55
      %p69 = scmp.eq.s32.totalorder %s33, 3
      %p70 = por %p68, %p69
      %p72 = scmp.ne.s32.totalorder %s55, %s71
      %p73 = scmp.eq.s32.totalorder %s33, 0
      %p74 = por %p72, %p73
      %s75 = ssub.s32 %s34, %s46
      %s76 = ssub.s32 %s35, %s42
      %s77 = sor.u32 %s75, %s76
      %p78 = scmp.eq.s32.totalorder %s77, 0
      %s80 = sadd.s32 %s79, 1
      %s81 = scalar_select %p78, %s79, %s80
      %p84 = pneg %p78
      %p85 = scmp.eq.s32.totalorder %s27, 3
      %p86 = por %p84, %p85
      %p87 = scmp.ne.s32.totalorder %s79, %s82
      %p88 = scmp.eq.s32.totalorder %s27, 0
      %p89 = por %p87, %p88
      %p90 = scmp.ne.s32.totalorder %s79, %s82
      %p91 = scmp.eq.s32.totalorder %s32, 3
      %p92 = por %p90, %p91
      %p93 = scmp.ne.s32.totalorder %s82, %s83
      %p94 = scmp.eq.s32.totalorder %s32, 0
      %p95 = por %p93, %p94
      %p96 = scmp.ne.s32.totalorder %s82, %s83
      %p97 = scmp.eq.s32.totalorder %s33, 3
      %p98 = por %p96, %p97
      %p100 = scmp.ne.s32.totalorder %s83, %s99
      %p101 = scmp.eq.s32.totalorder %s33, 0
      %p102 = por %p100, %p101
      %s103 = ssub.s32 %s34, %s46
      %s104 = ssub.s32 %s35, %s42
      %s105 = sor.u32 %s103, %s104
      %p106 = scmp.eq.s32.totalorder %s105, 0
      %s108 = sadd.s32 %s107, 1
      %s109 = scalar_select %p106, %s107, %s108
      %p112 = pneg %p106
      %p113 = scmp.eq.s32.totalorder %s27, 3
      %p114 = por %p112, %p113
      %p115 = scmp.ne.s32.totalorder %s107, %s110
      %p116 = scmp.eq.s32.totalorder %s27, 0
      %p117 = por %p115, %p116
      %p118 = scmp.ne.s32.totalorder %s107, %s110
      %p119 = scmp.eq.s32.totalorder %s32, 3
      %p120 = por %p118, %p119
      %p121 = scmp.ne.s32.totalorder %s110, %s111
      %p122 = scmp.eq.s32.totalorder %s32, 0
      %p123 = por %p121, %p122
      %p124 = scmp.ne.s32.totalorder %s110, %s111
      %p125 = scmp.eq.s32.totalorder %s33, 3
      %p126 = por %p124, %p125
      %p128 = scmp.ne.s32.totalorder %s111, %s127
      %p129 = scmp.eq.s32.totalorder %s33, 0
      %p130 = por %p128, %p129
      %s131 = ssub.s32 %s34, %s46
      %s132 = ssub.s32 %s35, %s42
      %s133 = sor.u32 %s131, %s132
      %p134 = scmp.eq.s32.totalorder %s133, 0
      %s136 = sadd.s32 %s135, 1
      %s137 = scalar_select %p134, %s135, %s136
      %p140 = pneg %p134
      %p141 = scmp.eq.s32.totalorder %s27, 3
      %p142 = por %p140, %p141
      %p143 = scmp.ne.s32.totalorder %s135, %s138
      %p144 = scmp.eq.s32.totalorder %s27, 0
      %p145 = por %p143, %p144
      %p146 = scmp.ne.s32.totalorder %s135, %s138
      %p147 = scmp.eq.s32.totalorder %s32, 3
      %p148 = por %p146, %p147
      %p149 = scmp.ne.s32.totalorder %s138, %s139
      %p150 = scmp.eq.s32.totalorder %s32, 0
      %p151 = por %p149, %p150
      %p152 = scmp.ne.s32.totalorder %s138, %s139
      %p153 = scmp.eq.s32.totalorder %s33, 3
      %p154 = por %p152, %p153
      %p156 = scmp.ne.s32.totalorder %s139, %s155
      %p157 = scmp.eq.s32.totalorder %s33, 0
      %p158 = por %p156, %p157
      %s159 = ssub.s32 %s34, %s46
      %s160 = ssub.s32 %s35, %s42
      %s161 = sor.u32 %s159, %s160
      %p162 = scmp.eq.s32.totalorder %s161, 0
      %s164 = sadd.s32 %s163, 1
      %s165 = scalar_select %p162, %s163, %s164
      %p168 = pneg %p162
      %p169 = scmp.eq.s32.totalorder %s27, 3
      %p170 = por %p168, %p169
      %p171 = scmp.ne.s32.totalorder %s163, %s166
      %p172 = scmp.eq.s32.totalorder %s27, 0
      %p173 = por %p171, %p172
      %p174 = scmp.ne.s32.totalorder %s163, %s166
      %p175 = scmp.eq.s32.totalorder %s32, 3
      %p176 = por %p174, %p175
      %p177 = scmp.ne.s32.totalorder %s166, %s167
      %p178 = scmp.eq.s32.totalorder %s32, 0
      %p179 = por %p177, %p178
      %p180 = scmp.ne.s32.totalorder %s166, %s167
      %p181 = scmp.eq.s32.totalorder %s33, 3
      %p182 = por %p180, %p181
      %p184 = scmp.ne.s32.totalorder %s167, %s183
      %p185 = scmp.eq.s32.totalorder %s33, 0
      %p186 = por %p184, %p185
      %s187 = ssub.s32 %s34, %s46
      %s188 = ssub.s32 %s35, %s42
      %s189 = sor.u32 %s187, %s188
      %p190 = scmp.eq.s32.totalorder %s189, 0
      %s192 = sadd.s32 %s191, 1
      %s193 = scalar_select %p190, %s191, %s192
      %p196 = pneg %p190
      %p197 = scmp.eq.s32.totalorder %s27, 3
      %p198 = por %p196, %p197
      %p199 = scmp.ne.s32.totalorder %s191, %s194
      %p200 = scmp.eq.s32.totalorder %s27, 0
      %p201 = por %p199, %p200
      %p202 = scmp.ne.s32.totalorder %s191, %s194
      %p203 = scmp.eq.s32.totalorder %s32, 3
      %p204 = por %p202, %p203
      %p205 = scmp.ne.s32.totalorder %s194, %s195
      %p206 = scmp.eq.s32.totalorder %s32, 0
      %p207 = por %p205, %p206
      %p208 = scmp.ne.s32.totalorder %s194, %s195
      %p209 = scmp.eq.s32.totalorder %s33, 3
      %p210 = por %p208, %p209
      %p212 = scmp.ne.s32.totalorder %s195, %s211
      %p213 = scmp.eq.s32.totalorder %s33, 0
      %p214 = por %p212, %p213
      %s215 = ssub.s32 %s34, %s46
      %p216 = scmp.eq.s32.totalorder %s215, 0
      %s218 = sadd.s32 %s217, 1
      %s219 = scalar_select %p216, %s217, %s218
      %p222 = pneg %p216
      %p223 = scmp.eq.s32.totalorder %s27, 3
      %p224 = por %p222, %p223
      %p225 = scmp.ne.s32.totalorder %s217, %s220
      %p226 = scmp.eq.s32.totalorder %s27, 0
      %p227 = por %p225, %p226
      %p228 = scmp.ne.s32.totalorder %s217, %s220
      %p229 = scmp.eq.s32.totalorder %s32, 3
      %p230 = por %p228, %p229
      %p231 = scmp.ne.s32.totalorder %s220, %s221
      %p232 = scmp.eq.s32.totalorder %s32, 0
      %p233 = por %p231, %p232
      %p234 = scmp.ne.s32.totalorder %s220, %s221
      %p235 = scmp.eq.s32.totalorder %s33, 3
      %p236 = por %p234, %p235
      %p238 = scmp.ne.s32.totalorder %s221, %s237
      %p239 = scmp.eq.s32.totalorder %s33, 0
      %p240 = por %p238, %p239
      %p241 = scmp.le.s32.totalorder 1, %s27
      %p242 = scmp.lt.s32.totalorder %s27, 5
      %p243 = pnand %p241, %p242
      %p244 = pneg %p243
      // Predicated region
      $region9: #{tpu_custom_call.1} parent=5 // pred_check
        _
      $region10: #{tpu_custom_call.1} parent=5 // pred_check_branch
        %246 = sbr.rel (%p243) target = $region12
      $region11: #{tpu_custom_call.1} parent=5 // pred_region
        %s247 = ssub.s32 %s27, 1
      $region12: #{tpu_custom_call.1} parent=5 // pred_fallthru
        _
      %p248 = scmp.lt.s32.totalorder %s27, 4
      // Predicated region
      $region13: #{tpu_custom_call.1} parent=5 // pred_check
        %p249 = pneg %p248
      $region14: #{tpu_custom_call.1} parent=5 // pred_check_branch
        %251 = sbr.rel (%p249) target = $region16
      $region15: #{tpu_custom_call.1} parent=5 // pred_region
        // Predicated region
        $region17: #{tpu_custom_call.1} parent=15 // pred_check
          %p252 = pneg %p61
        $region18: #{tpu_custom_call.1} parent=15 // pred_check_branch
          %254 = sbr.rel (%p252) target = $region20
        $region19: #{tpu_custom_call.1} parent=15 // pred_region
          %s255 = sand.u32 %s51, 1
          %s256 = scalar_lea.sflag [#allocation4], %s255
          %s257 = sand.u32 %s51, 1
          %s258 = smul.addr %s257, 24
          %s259 = scalar_lea.vmem [#allocation3], %s258
          %s261 = ssub.s32 384, 384
          %262 = vsyncadd %s256, %s261
          %s263 = smul.addr %s34, 6
          %s264 = sadd.s32 %s35, %s263
          %s265 = smul.addr %s264, 128
          %s266 = scalar_lea.hbm %s0, %s265
          %s267 = sshll.u32 %s259, 4
          %s268 = int_to_ptr.vmem [resolvable:$true] %s267
          %273 = dma.hbm_to_vmem [thread:$0]  %s266, 384, %s268, %s256, 256, 128, 8
        $region20: #{tpu_custom_call.1} parent=15 // pred_fallthru
          _
        // Predicated region
        $region21: #{tpu_custom_call.1} parent=15 // pred_check
          %p274 = pneg %p89
        $region22: #{tpu_custom_call.1} parent=15 // pred_check_branch
          %276 = sbr.rel (%p274) target = $region24
        $region23: #{tpu_custom_call.1} parent=15 // pred_region
          %s277 = sand.u32 %s27, 1
          %s278 = scalar_lea.sflag [#allocation7], %s277
          %s279 = sand.u32 %s79, 1
          %s280 = smul.addr %s279, 24
          %s281 = scalar_lea.vmem [#allocation6], %s280
          %s283 = ssub.s32 384, 384
          %284 = vsyncadd %s278, %s283
          %s285 = smul.addr %s34, 6
          %s286 = sadd.s32 %s35, %s285
          %s287 = smul.addr %s286, 128
          %s288 = scalar_lea.hbm %s1, %s287
          %s289 = sshll.u32 %s281, 4
          %s290 = int_to_ptr.vmem [resolvable:$true] %s289
          %295 = dma.hbm_to_vmem [thread:$0]  %s288, 384, %s290, %s278, 256, 128, 8
        $region24: #{tpu_custom_call.1} parent=15 // pred_fallthru
          _
        // Predicated region
        $region25: #{tpu_custom_call.1} parent=15 // pred_check
          %p296 = pneg %p117
        $region26: #{tpu_custom_call.1} parent=15 // pred_check_branch
          %298 = sbr.rel (%p296) target = $region28
        $region27: #{tpu_custom_call.1} parent=15 // pred_region
          %s299 = sand.u32 %s27, 1
          %s300 = scalar_lea.sflag [#allocation7], %s299
          %s301 = sand.u32 %s107, 1
          %s302 = smul.addr %s301, 24
          %s303 = scalar_lea.vmem [#allocation8], %s302
          %s305 = ssub.s32 384, 384
          %306 = vsyncadd %s300, %s305
          %s307 = smul.addr %s34, 6
          %s308 = sadd.s32 %s35, %s307
          %s309 = smul.addr %s308, 128
          %s310 = scalar_lea.hbm %s2, %s309
          %s311 = sshll.u32 %s303, 4
          %s312 = int_to_ptr.vmem [resolvable:$true] %s311
          %317 = dma.hbm_to_vmem [thread:$0]  %s310, 384, %s312, %s300, 256, 128, 8
        $region28: #{tpu_custom_call.1} parent=15 // pred_fallthru
          _
        // Predicated region
        $region29: #{tpu_custom_call.1} parent=15 // pred_check
          %p318 = pneg %p145
        $region30: #{tpu_custom_call.1} parent=15 // pred_check_branch
          %320 = sbr.rel (%p318) target = $region32
        $region31: #{tpu_custom_call.1} parent=15 // pred_region
          %s321 = sand.u32 %s27, 1
          %s322 = scalar_lea.sflag [#allocation10], %s321
          %s323 = sand.u32 %s135, 1
          %s324 = smul.addr %s323, 24
          %s325 = scalar_lea.vmem [#allocation9], %s324
          %s327 = ssub.s32 384, 384
          %328 = vsyncadd %s322, %s327
          %s329 = smul.addr %s34, 6
          %s330 = sadd.s32 %s35, %s329
          %s331 = smul.addr %s330, 128
          %s332 = scalar_lea.hbm %s3, %s331
          %s333 = sshll.u32 %s325, 4
          %s334 = int_to_ptr.vmem [resolvable:$true] %s333
          %339 = dma.hbm_to_vmem [thread:$0]  %s332, 384, %s334, %s322, 256, 128, 8
        $region32: #{tpu_custom_call.1} parent=15 // pred_fallthru
          _
        // Predicated region
        $region33: #{tpu_custom_call.1} parent=15 // pred_check
          %p340 = pneg %p173
        $region34: #{tpu_custom_call.1} parent=15 // pred_check_branch
          %342 = sbr.rel (%p340) target = $region36
        $region35: #{tpu_custom_call.1} parent=15 // pred_region
          %s343 = sand.u32 %s27, 1
          %s344 = scalar_lea.sflag [#allocation10], %s343
          %s345 = sand.u32 %s163, 1
          %s346 = smul.addr %s345, 8
          %s347 = scalar_lea.vmem [#allocation11], %s346
          %s349 = ssub.s32 128, 128
          %350 = vsyncadd %s344, %s349
          %s351 = smul.addr %s34, 2
          %s352 = sadd.s32 %s35, %s351
          %s353 = smul.addr %s352, 128
          %s354 = scalar_lea.hbm %s4, %s353
          %s356 = sshll.u32 %s347, 4
          %s357 = int_to_ptr.vmem [resolvable:$true] %s356
          %359 = dma.hbm_to_vmem [thread:$0]  %s354, 128, %s357, %s344
        $region36: #{tpu_custom_call.1} parent=15 // pred_fallthru
          _
        // Predicated region
        $region37: #{tpu_custom_call.1} parent=15 // pred_check
          %p360 = pneg %p201
        $region38: #{tpu_custom_call.1} parent=15 // pred_check_branch
          %362 = sbr.rel (%p360) target = $region40
        $region39: #{tpu_custom_call.1} parent=15 // pred_region
          %s363 = sand.u32 %s191, 1
          %s364 = scalar_lea.sflag [#allocation13], %s363
          %s365 = sand.u32 %s191, 1
          %s366 = smul.addr %s365, 8
          %s367 = scalar_lea.vmem [#allocation12], %s366
          %s369 = ssub.s32 128, 128
          %370 = vsyncadd %s364, %s369
          %s371 = smul.addr %s34, 2
          %s372 = sadd.s32 %s35, %s371
          %s373 = smul.addr %s372, 128
          %s374 = scalar_lea.hbm %s5, %s373
          %s376 = sshll.u32 %s367, 4
          %s377 = int_to_ptr.vmem [resolvable:$true] %s376
          %379 = dma.hbm_to_vmem [thread:$0]  %s374, 128, %s377, %s364
        $region40: #{tpu_custom_call.1} parent=15 // pred_fallthru
          _
      $region16: #{tpu_custom_call.1} parent=5 // pred_fallthru
        _
      %p380 = scmp.le.s32.totalorder 1, %s27
      %p381 = scmp.lt.s32.totalorder %s27, 5
      %p382 = pnand %p380, %p381
      %p383 = pneg %p382
      // Predicated region
      $region41: #{tpu_custom_call.1} parent=5 // pred_check
        _
      $region42: #{tpu_custom_call.1} parent=5 // pred_check_branch
        %385 = sbr.rel (%p382) target = $region44
      $region43: #{tpu_custom_call.1} parent=5 // pred_region
        %s386 = ssub.s32 %s27, 1
        %s387 = sand.u32 %s54, 1
        %s388 = scalar_lea.sflag [#allocation4], %s387
        %s389 = sand.u32 %s54, 1
        %s390 = smul.addr %s389, 24
        %s391 = scalar_lea.vmem [#allocation3], %s390
        // Predicated region
        $region45: #{tpu_custom_call.1} parent=43 // pred_check
          %p392 = pneg %p67
        $region46: #{tpu_custom_call.1} parent=43 // pred_check_branch
          %394 = sbr.rel (%p392) target = $region48
        $region47: #{tpu_custom_call.1} parent=43 // pred_region
          %395 = dma.done %s388, 384
        $region48: #{tpu_custom_call.1} parent=43 // pred_fallthru
          _
        %s396 = sand.u32 %s32, 1
        %s397 = scalar_lea.sflag [#allocation7], %s396
        %s398 = sand.u32 %s82, 1
        %s399 = smul.addr %s398, 24
        %s400 = scalar_lea.vmem [#allocation6], %s399
        // Predicated region
        $region49: #{tpu_custom_call.1} parent=43 // pred_check
          %p401 = pneg %p95
        $region50: #{tpu_custom_call.1} parent=43 // pred_check_branch
          %403 = sbr.rel (%p401) target = $region52
        $region51: #{tpu_custom_call.1} parent=43 // pred_region
          %404 = dma.done %s397, 384
        $region52: #{tpu_custom_call.1} parent=43 // pred_fallthru
          _
        %s405 = sand.u32 %s32, 1
        %s406 = scalar_lea.sflag [#allocation7], %s405
        %s407 = sand.u32 %s110, 1
        %s408 = smul.addr %s407, 24
        %s409 = scalar_lea.vmem [#allocation8], %s408
        // Predicated region
        $region53: #{tpu_custom_call.1} parent=43 // pred_check
          %p410 = pneg %p123
        $region54: #{tpu_custom_call.1} parent=43 // pred_check_branch
          %412 = sbr.rel (%p410) target = $region56
        $region55: #{tpu_custom_call.1} parent=43 // pred_region
          %413 = dma.done %s406, 384
        $region56: #{tpu_custom_call.1} parent=43 // pred_fallthru
          _
        %s414 = sand.u32 %s32, 1
        %s415 = scalar_lea.sflag [#allocation10], %s414
        %s416 = sand.u32 %s138, 1
        %s417 = smul.addr %s416, 24
        %s418 = scalar_lea.vmem [#allocation9], %s417
        // Predicated region
        $region57: #{tpu_custom_call.1} parent=43 // pred_check
          %p419 = pneg %p151
        $region58: #{tpu_custom_call.1} parent=43 // pred_check_branch
          %421 = sbr.rel (%p419) target = $region60
        $region59: #{tpu_custom_call.1} parent=43 // pred_region
          %422 = dma.done %s415, 384
        $region60: #{tpu_custom_call.1} parent=43 // pred_fallthru
          _
        %s423 = sand.u32 %s32, 1
        %s424 = scalar_lea.sflag [#allocation10], %s423
        %s425 = sand.u32 %s166, 1
        %s426 = smul.addr %s425, 8
        %s427 = scalar_lea.vmem [#allocation11], %s426
        // Predicated region
        $region61: #{tpu_custom_call.1} parent=43 // pred_check
          %p428 = pneg %p179
        $region62: #{tpu_custom_call.1} parent=43 // pred_check_branch
          %430 = sbr.rel (%p428) target = $region64
        $region63: #{tpu_custom_call.1} parent=43 // pred_region
          %431 = dma.done %s424, 128
        $region64: #{tpu_custom_call.1} parent=43 // pred_fallthru
          _
        %s432 = sand.u32 %s194, 1
        %s433 = scalar_lea.sflag [#allocation13], %s432
        %s434 = sand.u32 %s194, 1
        %s435 = smul.addr %s434, 8
        %s436 = scalar_lea.vmem [#allocation12], %s435
        // Predicated region
        $region65: #{tpu_custom_call.1} parent=43 // pred_check
          %p437 = pneg %p207
        $region66: #{tpu_custom_call.1} parent=43 // pred_check_branch
          %439 = sbr.rel (%p437) target = $region68
        $region67: #{tpu_custom_call.1} parent=43 // pred_region
          %440 = dma.done %s433, 128
        $region68: #{tpu_custom_call.1} parent=43 // pred_fallthru
          _
        %s441 = sand.u32 %s54, 1
        %s442 = scalar_lea.sflag [#allocation4], %s441
        %s443 = sand.u32 %s54, 1
        %s444 = smul.addr %s443, 24
        %s445 = scalar_lea.vmem [#allocation3], %s444
        %p446 = pneg %p67
        %p447 = pneg %p64
        %s448 = sand.u32 %s32, 1
        %s449 = scalar_lea.sflag [#allocation7], %s448
        %s450 = sand.u32 %s82, 1
        %s451 = smul.addr %s450, 24
        %s452 = scalar_lea.vmem [#allocation6], %s451
        %p453 = pneg %p95
        %p454 = pneg %p92
        %s455 = sand.u32 %s32, 1
        %s456 = scalar_lea.sflag [#allocation7], %s455
        %s457 = sand.u32 %s110, 1
        %s458 = smul.addr %s457, 24
        %s459 = scalar_lea.vmem [#allocation8], %s458
        %p460 = pneg %p123
        %p461 = pneg %p120
        %s462 = sand.u32 %s32, 1
        %s463 = scalar_lea.sflag [#allocation10], %s462
        %s464 = sand.u32 %s138, 1
        %s465 = smul.addr %s464, 24
        %s466 = scalar_lea.vmem [#allocation9], %s465
        %p467 = pneg %p151
        %p468 = pneg %p148
        %s469 = sand.u32 %s32, 1
        %s470 = scalar_lea.sflag [#allocation10], %s469
        %s471 = sand.u32 %s166, 1
        %s472 = smul.addr %s471, 8
        %s473 = scalar_lea.vmem [#allocation11], %s472
        %p474 = pneg %p179
        %p475 = pneg %p176
        %s476 = sand.u32 %s194, 1
        %s477 = scalar_lea.sflag [#allocation13], %s476
        %s478 = sand.u32 %s194, 1
        %s479 = smul.addr %s478, 8
        %s480 = scalar_lea.vmem [#allocation12], %s479
        %p481 = pneg %p207
        %p482 = pneg %p204
        %p483 = pneg %p233
        %p484 = pneg %p230
        %s485 = sand.u32 %s220, 1
        %s486 = scalar_lea.sflag [#allocation5], %s485
        %s487 = sand.u32 %s220, 1
        %s488 = smul.addr %s487, 40
        %s489 = scalar_lea.vmem [#allocation14], %s488
        %p490 = scmp.eq.s32.totalorder %s37, 0
        // Predicated region
        $region69: #{tpu_custom_call.1} parent=43 // pred_check
          %p491 = pneg %p490
        $region70: #{tpu_custom_call.1} parent=43 // pred_check_branch
          %493 = sbr.rel (%p491) target = $region72
        $region71: #{tpu_custom_call.1} parent=43 // pred_region
          %494 = vst [vmem:[%s489] sm:$0xff] 0.0
          %495 = vst [vmem:[%s489 + $0x8] sm:$0xff] 0.0
          %496 = vst [vmem:[%s489 + $0x10] sm:$0xff] 0.0
          %497 = vst [vmem:[%s489 + $0x18] sm:$0xff] 0.0
          %498 = vst [vmem:[%s489 + $0x20] sm:$0xff] 0.0
          %499 = vst [vmem:[#allocation2] sm:$0x1] 0.0
          %500 = vst [vmem:[#allocation2 + $0x1] sm:$0x1] 0.0
        $region72: #{tpu_custom_call.1} parent=43 // pred_fallthru
          _
        %v501 = vld [vmem:[%s391] sm:$0xff]
        %v502 = vld [vmem:[%s391 + $0x8] sm:$0xff]
        %v503 = vld [vmem:[%s391 + $0x10] sm:$0xff]
        %v504 = vld [vmem:[%s400] sm:$0xff]
        %v505 = vld [vmem:[%s400 + $0x8] sm:$0xff]
        %v506 = vld [vmem:[%s400 + $0x10] sm:$0xff]
        %v507 = vld [vmem:[%s409] sm:$0xff]
        %v508 = vld [vmem:[%s409 + $0x8] sm:$0xff]
        %v509 = vld [vmem:[%s409 + $0x10] sm:$0xff]
        %v510 = vld [vmem:[%s418] sm:$0xff]
        %v511 = vld [vmem:[%s418 + $0x8] sm:$0xff]
        %v512 = vld [vmem:[%s418 + $0x10] sm:$0xff]
        %v513 = vld [vmem:[%s427] sm:$0xff]
        %v514 = vld [vmem:[%s436] sm:$0xff]
        %v515 = vsub.f32 %v507, %v510
        %v516 = vsub.f32 %v508, %v511
        %v517 = vsub.f32 %v509, %v512
        %v518 = vsub.f32 %v507, %v501
        %v519 = vsub.f32 %v508, %v502
        %v520 = vsub.f32 %v509, %v503
        %v521 = vsub.f32 %v510, %v504
        %v522 = vsub.f32 %v511, %v505
        %v523 = vsub.f32 %v512, %v506
        %v524 = vld [vmem:[%s489] sm:$0xff]
        %v525 = vmul.f32 %v515, %v515
        %v526 = vmul.f32 %v516, %v516
        %v527 = vmul.f32 %v517, %v517
        %v528 = vmul.f32 %v518, %v518
        %v529 = vmul.f32 %v519, %v519
        %v530 = vmul.f32 %v520, %v520
        %v531 = vadd.f32 %v525, %v528
        %v532 = vadd.f32 %v526, %v529
        %v533 = vadd.f32 %v527, %v530
        %v534 = vmul.f32 %v521, %v521
        %v535 = vmul.f32 %v522, %v522
        %v536 = vmul.f32 %v523, %v523
        %v537 = vadd.f32 %v531, %v534
        %v538 = vadd.f32 %v532, %v535
        %v539 = vadd.f32 %v533, %v536
        %v540 = vadd.f32 %v537, %v538
        %v541 = vadd.f32 %v540, %v539
        %v542 = vadd.f32 %v524, %v541
        %543 = vst [vmem:[%s489] sm:$0xff] %v542
        %v544 = vsub.f32 %v501, %v504
        %v545 = vsub.f32 %v502, %v505
        %v546 = vsub.f32 %v503, %v506
        %s547 = scalar_lea.vmem %s489, 8 [#allocation14]
        %v548 = vld [vmem:[%s547] sm:$0xff]
        %v549 = vmul.f32 %v544, %v544
        %v550 = vmul.f32 %v545, %v545
        %v551 = vmul.f32 %v546, %v546
        %v552 = vadd.f32 %v549, %v550
        %v553 = vadd.f32 %v552, %v551
        %v554 = vadd.f32 %v548, %v553
        %555 = vst [vmem:[%s547] sm:$0xff] %v554
        %v556 = vmul.f32 %v501, 0.299
        %v557 = vmul.f32 %v502, 0.587
        %v558 = vadd.f32 %v556, %v557
        %v559 = vmul.f32 %v503, 0.114
        %v560 = vadd.f32 %v558, %v559
        %v561 = vmul.f32 %v504, 0.299
        %v562 = vmul.f32 %v505, 0.587
        %v563 = vadd.f32 %v561, %v562
        %v564 = vmul.f32 %v506, 0.114
        %v565 = vadd.f32 %v563, %v564
        %v566 = vmul.f32 %v507, 0.299
        %v567 = vmul.f32 %v508, 0.587
        %v568 = vadd.f32 %v566, %v567
        %v569 = vmul.f32 %v509, 0.114
        %v570 = vadd.f32 %v568, %v569
        %v571 = vmul.f32 %v510, 0.299
        %v572 = vmul.f32 %v511, 0.587
        %v573 = vadd.f32 %v571, %v572
        %v574 = vmul.f32 %v512, 0.114
        %v575 = vadd.f32 %v573, %v574
        %s576 = scalar_lea.vmem %s489, 16 [#allocation14]
        %v577 = vld [vmem:[%s576] sm:$0xff]
        %v578 = vmul.f32 %v513, 1.5
        %v579 = vmul.f32 %v578, 1.442695
        %v580 = vpow.pop %v579
        %v581 = vsub.f32 %v580, 2.0
        %v582 = vmul.f32 %v560, 1.5
        %v583 = vmul.f32 %v582, 1.442695
        %v584 = vpow.pop %v583
        %v585 = vsub.f32 %v584, 2.0
        %v586 = vmul.f32 %v581, %v585
        %v587 = vadd.f32 %v586, 1.0
        %v588 = vmax.f32 %v587, 0.0
        %v589 = vmin.f32 %v588, 5.0
        %v590 = vmul.f32 %v514, 1.5
        %v591 = vmul.f32 %v590, 1.442695
        %v592 = vpow.pop %v591
        %v593 = vsub.f32 %v592, 2.0
        %v594 = vmul.f32 %v565, 1.5
        %v595 = vmul.f32 %v594, 1.442695
        %v596 = vpow.pop %v595
        %v597 = vsub.f32 %v596, 2.0
        %v598 = vmul.f32 %v593, %v597
        %v599 = vadd.f32 %v598, 1.0
        %v600 = vmax.f32 %v599, 0.0
        %v601 = vmin.f32 %v600, 5.0
        %v602 = vadd.f32 %v589, %v601
        %v603 = vadd.f32 %v577, %v602
        %604 = vst [vmem:[%s576] sm:$0xff] %v603
        %v605 = vlaneseq
        %v606 = vand.u32 %v605, 127
        %vm607 = vcmp.eq.s32.totalorder %v606, 0
        %v608 = vlaneseq
        %v609 = vshrl.u32 %v608, 7
        %vm610 = vcmp.eq.s32.totalorder %v609, 0
        %611 = vrot.lane.b32.xlu0 %v570, 1
        %v612 = vpop.permute.xlu0 %611
        %v613 = vsub.f32 %v612, %v570
        %v614 = vand.u32 2147483647, %v613
        %616 = vrot.lane.b32.xlu0 %v570, 1
        %v617 = vpop.permute.xlu0 %616
        %v619 = vsub.f32 %v570, %v617
        %v620 = vand.u32 2147483647, %v619
        %v621 = vmul.f32 %v620, -10.0
        %v622 = vmul.f32 %v621, 1.442695
        %v623 = vpow.pop %v622
        %v624 = vmul.f32 %v620, %v623
        %v625 = vmul.f32 %v614, -10.0
        %v626 = vmul.f32 %v625, 1.442695
        %v627 = vpow.pop %v626
        %v628 = vmul.f32 %v614, %v627
        %630 = vset.pattern.permute.xlu0 0
        %631 = vperm.xlu0 %630, %v624
        %v632 = vpop.permute.xlu0 %631
        %v634 = vsel %vm607, %v632, 0.0
        %v635 = vsub.f32 %v628, %v634
        %v636 = vrot.slane %v570, 7
        %v637 = vsub.f32 %v636, %v570
        %v638 = vand.u32 2147483647, %v637
        %v639 = vrot.slane %v570, 7
        %v641 = vsub.f32 %v570, %v639
        %v642 = vand.u32 2147483647, %v641
        %v643 = vmul.f32 %v642, -10.0
        %v644 = vmul.f32 %v643, 1.442695
        %v645 = vpow.pop %v644
        %v646 = vmul.f32 %v642, %v645
        %v647 = vld [vmem:[#allocation2] sm:$0x1]
        %v648 = vsub.f32 %v570, %v647
        %v649 = vand.u32 2147483647, %v648
        %p650 = scmp.gt.s32.totalorder %s37, 0
        %v651 = vmul.f32 %v649, -10.0
        %v652 = vmul.f32 %v651, 1.442695
        %v653 = vpow.pop %v652
        %v654 = vmul.f32 %v649, %v653
        %s655 = scalar_select %p650, 1, 0
        %v656 = vstv %s655
        %vm657 = vcmp.eq.s32.totalorder %v656, 1
        %v658 = vsel %vm657, %v654, 0.0
        %v659 = vmul.f32 %v638, -10.0
        %v660 = vmul.f32 %v659, 1.442695
        %v661 = vpow.pop %v660
        %v662 = vmul.f32 %v638, %v661
        %v663 = vsub.f32 %v658, %v646
        %v664 = vlaneseq
        %v665 = vshrl.u32 %v664, 7
        %v666 = vsub.s32 0, %v665
        %v667 = vrot.slane %v663, %v666
        %v668 = vsel %vm610, %v667, 0.0
        %v669 = vadd.f32 %v662, %v668
        %670 = vst [vmem:[#allocation2 - $0x7] sm:$0x80] %v570
        %671 = vrot.lane.b32.xlu0 %v575, 1
        %v672 = vpop.permute.xlu0 %671
        %v673 = vsub.f32 %v672, %v575
        %v674 = vand.u32 2147483647, %v673
        %676 = vrot.lane.b32.xlu0 %v575, 1
        %v677 = vpop.permute.xlu0 %676
        %v679 = vsub.f32 %v575, %v677
        %v680 = vand.u32 2147483647, %v679
        %v681 = vmul.f32 %v680, -10.0
        %v682 = vmul.f32 %v681, 1.442695
        %v683 = vpow.pop %v682
        %v684 = vmul.f32 %v680, %v683
        %v685 = vmul.f32 %v674, -10.0
        %v686 = vmul.f32 %v685, 1.442695
        %v687 = vpow.pop %v686
        %v688 = vmul.f32 %v674, %v687
        %690 = vset.pattern.permute.xlu0 0
        %691 = vperm.xlu0 %690, %v684
        %v692 = vpop.permute.xlu0 %691
        %v694 = vsel %vm607, %v692, 0.0
        %v695 = vsub.f32 %v688, %v694
        %v696 = vrot.slane %v575, 7
        %v697 = vsub.f32 %v696, %v575
        %v698 = vand.u32 2147483647, %v697
        %v699 = vrot.slane %v575, 7
        %v701 = vsub.f32 %v575, %v699
        %v702 = vand.u32 2147483647, %v701
        %v703 = vmul.f32 %v702, -10.0
        %v704 = vmul.f32 %v703, 1.442695
        %v705 = vpow.pop %v704
        %v706 = vmul.f32 %v702, %v705
        %s707 = scalar_lea.vmem [#allocation2], 1
        %v708 = vld [vmem:[%s707] sm:$0x1]
        %v709 = vsub.f32 %v575, %v708
        %v710 = vand.u32 2147483647, %v709
        %v711 = vmul.f32 %v710, -10.0
        %v712 = vmul.f32 %v711, 1.442695
        %v713 = vpow.pop %v712
        %v714 = vmul.f32 %v710, %v713
        %v715 = vsel %vm657, %v714, 0.0
        %v716 = vmul.f32 %v698, -10.0
        %v717 = vmul.f32 %v716, 1.442695
        %v718 = vpow.pop %v717
        %v719 = vmul.f32 %v698, %v718
        %v720 = vsub.f32 %v715, %v706
        %v721 = vlaneseq
        %v722 = vshrl.u32 %v721, 7
        %v723 = vsub.s32 0, %v722
        %v724 = vrot.slane %v720, %v723
        %v725 = vsel %vm610, %v724, 0.0
        %v726 = vadd.f32 %v719, %v725
        %727 = vst [vmem:[%s707 - $0x7] sm:$0x80] %v575
        %s728 = scalar_lea.vmem %s489, 24 [#allocation14]
        %v729 = vld [vmem:[%s728] sm:$0xff]
        %v730 = vadd.f32 %v635, %v695
        %v731 = vadd.f32 %v729, %v730
        %732 = vst [vmem:[%s728] sm:$0xff] %v731
        %s733 = scalar_lea.vmem %s489, 32 [#allocation14]
        %v734 = vld [vmem:[%s733] sm:$0xff]
        %v735 = vadd.f32 %v669, %v726
        %v736 = vadd.f32 %v734, %v735
        %737 = vst [vmem:[%s733] sm:$0xff] %v736
        %s738 = sand.u32 %s220, 1
        %s739 = scalar_lea.sflag [#allocation5], %s738
        %s740 = sand.u32 %s220, 1
        %s741 = smul.addr %s740, 40
        %s742 = scalar_lea.vmem [#allocation14], %s741
        // Predicated region
        $region73: #{tpu_custom_call.1} parent=43 // pred_check
          %p743 = pneg %p230
        $region74: #{tpu_custom_call.1} parent=43 // pred_check_branch
          %745 = sbr.rel (%p743) target = $region76
        $region75: #{tpu_custom_call.1} parent=43 // pred_region
          %s747 = ssub.s32 640, 640
          %748 = vsyncadd %s739, %s747
          %s749 = smul.addr %s36, 5
          %s750 = smul.addr %s749, 128
          %s751 = scalar_lea.hbm %s6, %s750
          %s752 = sshll.u32 %s742, 4
          %s753 = int_to_ptr.vmem [resolvable:$true] %s752
          %758 = dma.vmem_to_hbm [thread:$0]  %s753, 640, %s751, %s739, 128, 128, 8
        $region76: #{tpu_custom_call.1} parent=43 // pred_fallthru
          _
      $region44: #{tpu_custom_call.1} parent=5 // pred_fallthru
        _
      %p759 = scmp.le.s32.totalorder 2, %s27
      // Predicated region
      $region77: #{tpu_custom_call.1} parent=5 // pred_check
        %p760 = pneg %p759
      $region78: #{tpu_custom_call.1} parent=5 // pred_check_branch
        %762 = sbr.rel (%p760) target = $region80
      $region79: #{tpu_custom_call.1} parent=5 // pred_region
        %s763 = ssub.s32 %s27, 2
        // Predicated region
        $region81: #{tpu_custom_call.1} parent=79 // pred_check
          %p764 = pneg %p236
        $region82: #{tpu_custom_call.1} parent=79 // pred_check_branch
          %766 = sbr.rel (%p764) target = $region84
        $region83: #{tpu_custom_call.1} parent=79 // pred_region
          %s767 = sand.u32 %s221, 1
          %s768 = scalar_lea.sflag [#allocation5], %s767
          %s769 = sand.u32 %s221, 1
          %s770 = smul.addr %s769, 40
          %s771 = scalar_lea.vmem [#allocation14], %s770
          %772 = dma.done %s768, 640
        $region84: #{tpu_custom_call.1} parent=79 // pred_fallthru
          _
      $region80: #{tpu_custom_call.1} parent=5 // pred_fallthru
        _
    $region6: #{tpu_custom_call.1} parent=1 // loop_footer
      %s31 = sadd.s32 1, %s27
    $region7: #{tpu_custom_call.1} parent=1 // loop_footer_branch
      %26 = sbr.rel target = $region3
    $region8: #{tpu_custom_call.1} parent=1 // loop_exit
      _
    %773 = vsyncpa [#allocation4], 1
    %s774 = scalar_lea.sflag [#allocation4], 1
    %775 = vsyncpa %s774, 1
    %776 = vsyncpa [#allocation7], 1
    %s777 = scalar_lea.sflag [#allocation7], 1
    %778 = vsyncpa %s777, 1
    %779 = vsyncpa [#allocation10], 1
    %s780 = scalar_lea.sflag [#allocation10], 1
    %781 = vsyncpa %s780, 1
    %782 = vsyncpa [#allocation13], 1
    %s783 = scalar_lea.sflag [#allocation13], 1
    %784 = vsyncpa %s783, 1
    %785 = vsyncpa [#allocation5], 1
    %s786 = scalar_lea.sflag [#allocation5], 1
    %787 = vsyncpa %s786, 1

</llo_original>
